<compile_context>
chip_gen: v7x
topology: tpu7x:2x2x1
jax: 0.10.0
libtpu: 0.0.40
codegen_flags: <defaults>
</compile_context>

<pallas_src>
import functools

import jax
import jax.numpy as jnp
from jax.experimental import pallas as pl
from jax.experimental.pallas import tpu as pltpu

LANES = 128
SUBLANES = 8
MAX_BLOCK_ROWS = 4096          # 4096 x 128 x 4B = 2 MiB per input block
N_SPLITS_DEFAULT = 2           # leading "parallel" axis -> both TCs on v7x


def _loss_sums_kernel(x_ref, y_ref, out_ref, acc_abs, acc_sq, *,
                      block_rows, valid_rows, mask_rows):
    i = pl.program_id(1)

    # Zero the running (8,128) accumulators at the start of each reduction.
    @pl.when(i == 0)
    def _():
        acc_abs[...] = jnp.zeros_like(acc_abs)
        acc_sq[...] = jnp.zeros_like(acc_sq)

    x = x_ref[...]
    y = y_ref[...]
    if x.dtype != jnp.float32:
        x = x.astype(jnp.float32)
        y = y.astype(jnp.float32)
    d = x - y

    if mask_rows:
        # Zero rows past the end of the flattened input: partial boundary
        # blocks and fully-out-of-range (clamped) grid steps contribute 0.
        tile_idx = pl.program_id(0) * pl.num_programs(1) + i
        row0 = tile_idx * block_rows
        row_ids = row0 + jax.lax.broadcasted_iota(
            jnp.int32, (block_rows, LANES), 0)
        d = jnp.where(row_ids < valid_rows, d, 0.0)

    # Fold the tile onto an (8, 128) slab: pure elementwise VPU adds
    # (no per-step cross-lane reduction; this hides entirely under the DMA).
    d3 = d.reshape(block_rows // SUBLANES, SUBLANES, LANES)
    acc_abs[...] += jnp.sum(jnp.abs(d3), axis=0)
    acc_sq[...] += jnp.sum(d3 * d3, axis=0)

    # Only the last step of the sequential reduction axis writes the output.
    @pl.when(i == pl.num_programs(1) - 1)
    def _():
        out_ref[0, :SUBLANES, :] = acc_abs[...]
        out_ref[0, SUBLANES:, :] = acc_sq[...]


def my_loss(xs, ys):
    """0.8 * mean(|xs - ys|) + 0.2 * mean((xs - ys)^2), exactly like MyLoss."""
    assert xs.shape == ys.shape
    n_elems = xs.size

    x_flat = xs.reshape(-1)
    y_flat = ys.reshape(-1)

    # Sub-32-bit dtypes pack along sublanes: keep row counts aligned to the
    # native tile so the (block_rows, 128) BlockSpec is always legal.
    itemsize = jnp.dtype(xs.dtype).itemsize
    row_align = SUBLANES * max(1, 4 // itemsize)      # 8 for f32, 16 for bf16
    elem_align = row_align * LANES

    # Pad only to one native-tile multiple (a no-op for typical sizes where
    # n % 1024 == 0), so the flat stream reshapes to (rows, 128).
    pad = (-n_elems) % elem_align
    if pad:
        x_flat = jnp.pad(x_flat, (0, pad))
        y_flat = jnp.pad(y_flat, (0, pad))

    rows = x_flat.size // LANES                 # multiple of row_align
    x2d = x_flat.reshape(rows, LANES)
    y2d = y_flat.reshape(rows, LANES)

    block_rows = min(MAX_BLOCK_ROWS, rows)      # multiple of row_align
    num_blocks = pl.cdiv(rows, block_rows)
    n_splits = N_SPLITS_DEFAULT if num_blocks >= N_SPLITS_DEFAULT else 1
    tiles_per_split = pl.cdiv(num_blocks, n_splits)

    needs_clamp = n_splits * tiles_per_split > num_blocks
    mask_rows = needs_clamp or (rows % block_rows != 0)

    def in_index_map(p, i):
        idx = p * tiles_per_split + i
        if needs_clamp:
            # Overhanging steps re-load the last real block; the in-kernel
            # row mask zeroes their contribution.
            idx = jnp.minimum(idx, num_blocks - 1)
        return (idx, 0)

    kernel = functools.partial(
        _loss_sums_kernel,
        block_rows=block_rows,
        valid_rows=rows,
        mask_rows=mask_rows,
    )

    partials = pl.pallas_call(
        kernel,
        out_shape=jax.ShapeDtypeStruct((n_splits, 2 * SUBLANES, LANES),
                                       jnp.float32),
        grid_spec=pltpu.PrefetchScalarGridSpec(
            num_scalar_prefetch=0,
            grid=(n_splits, tiles_per_split),
            in_specs=[
                pl.BlockSpec((block_rows, LANES), in_index_map),
                pl.BlockSpec((block_rows, LANES), in_index_map),
            ],
            out_specs=pl.BlockSpec((1, 2 * SUBLANES, LANES),
                                   lambda p, i: (p, 0, 0)),
            scratch_shapes=[
                pltpu.VMEM((SUBLANES, LANES), jnp.float32),
                pltpu.VMEM((SUBLANES, LANES), jnp.float32),
            ],
        ),
        compiler_params=pltpu.CompilerParams(
            dimension_semantics=("parallel", "arbitrary"),
            vmem_limit_bytes=32 << 20,
        ),
        cost_estimate=pl.CostEstimate(
            flops=5 * n_elems,
            transcendentals=0,
            bytes_accessed=2 * n_elems * itemsize,
        ),
    )(x2d, y2d)

    # Tiny final reduction of the partials slab (fuses in XLA).
    inv_n = 1.0 / float(n_elems)
    abs_sum = jnp.sum(partials[:, :SUBLANES, :])
    sq_sum = jnp.sum(partials[:, SUBLANES:, :])
    return 0.8 * abs_sum * inv_n + 0.2 * sq_sum * inv_n


if __name__ == "__main__":
    key = jax.random.PRNGKey(0)
    kx, ky = jax.random.split(key)
    # Small shapes consistent with an image-like regression loss.
    xs = jax.random.normal(kx, (2, 4, 16, 16), dtype=jnp.float32)
    ys = jax.random.normal(ky, (2, 4, 16, 16), dtype=jnp.float32)

    loss = jax.block_until_ready(my_loss(xs, ys))

    # Pure-JAX reference check.
    ref = 0.8 * jnp.mean(jnp.abs(xs - ys)) + 0.2 * jnp.mean((xs - ys) ** 2)
    assert jnp.allclose(loss, ref, rtol=1e-5, atol=1e-6), (loss, ref)

    print("KERNEL_OK")
</pallas_src>

<mosaic_0001>
module attributes {stable_mosaic.version = 11 : i64} {
  func.func @_loss_sums_kernel(%arg0: i32, %arg1: i32, %arg2: memref<16x128xf32, #tpu.memory_space<vmem>>, %arg3: memref<16x128xf32, #tpu.memory_space<vmem>>, %arg4: memref<1x16x128xf32, #tpu.memory_space<vmem>>, %arg5: memref<8x128xf32, #tpu.memory_space<vmem>>, %arg6: memref<8x128xf32, #tpu.memory_space<vmem>>) attributes {dimension_semantics = [#tpu.dimension_semantics<parallel>, #tpu.dimension_semantics<arbitrary>], iteration_bounds = array<i64: 1, 1>, scalar_prefetch = 0 : i64, scratch_operands = 2 : i64, tpu.core_type = #tpu.core_type<tc>, window_params = [{transform_indices = @transform_0, window_bounds = array<i64: 16, 128>}, {transform_indices = @transform_1, window_bounds = array<i64: 16, 128>}, {transform_indices = @transform_2, window_bounds = array<i64: 1, 16, 128>}]} {
    %c0_i32 = arith.constant 0 : i32
    %0 = arith.cmpi eq, %arg1, %c0_i32 : i32
    %1 = arith.extui %0 : i1 to i32
    %c0_i32_0 = arith.constant 0 : i32
    %2 = arith.cmpi ne, %1, %c0_i32_0 : i32
    scf.if %2 {
      %cst_15 = arith.constant 0.000000e+00 : f32
      %20 = vector.broadcast %cst_15 : f32 to vector<8x128xf32>
      %c0_16 = arith.constant 0 : index
      %c0_17 = arith.constant 0 : index
      %21 = vector.load %arg5[%c0_16, %c0_17] : memref<8x128xf32, #tpu.memory_space<vmem>>, vector<8x128xf32>
      tpu.vector_store %arg5[%c0_16, %c0_17], %20 {strides = array<i32>} : memref<8x128xf32, #tpu.memory_space<vmem>>, vector<8x128xf32>,
      %cst_18 = arith.constant 0.000000e+00 : f32
      %22 = vector.broadcast %cst_18 : f32 to vector<8x128xf32>
      %c0_19 = arith.constant 0 : index
      %c0_20 = arith.constant 0 : index
      %23 = vector.load %arg6[%c0_19, %c0_20] : memref<8x128xf32, #tpu.memory_space<vmem>>, vector<8x128xf32>
      tpu.vector_store %arg6[%c0_19, %c0_20], %22 {strides = array<i32>} : memref<8x128xf32, #tpu.memory_space<vmem>>, vector<8x128xf32>,
    } else {
    }
    %c0 = arith.constant 0 : index
    %c0_1 = arith.constant 0 : index
    %3 = vector.load %arg2[%c0, %c0_1] : memref<16x128xf32, #tpu.memory_space<vmem>>, vector<16x128xf32>
    %c0_2 = arith.constant 0 : index
    %c0_3 = arith.constant 0 : index
    %4 = vector.load %arg3[%c0_2, %c0_3] : memref<16x128xf32, #tpu.memory_space<vmem>>, vector<16x128xf32>
    %5 = arith.subf %3, %4 : vector<16x128xf32>
    %6 = vector.shape_cast %5 : vector<16x128xf32> to vector<2x8x128xf32>
    %c0_4 = arith.constant 0 : index
    %c0_5 = arith.constant 0 : index
    %7 = vector.load %arg5[%c0_4, %c0_5] : memref<8x128xf32, #tpu.memory_space<vmem>>, vector<8x128xf32>
    %8 = math.absf %6 : vector<2x8x128xf32>
    %cst = arith.constant dense<0.000000e+00> : vector<8x128xf32>
    %9 = vector.multi_reduction <add>, %8, %cst [0] : vector<2x8x128xf32> to vector<8x128xf32>
    %10 = arith.addf %7, %9 : vector<8x128xf32>
    %c0_6 = arith.constant 0 : index
    %c0_7 = arith.constant 0 : index
    %11 = vector.load %arg5[%c0_6, %c0_7] : memref<8x128xf32, #tpu.memory_space<vmem>>, vector<8x128xf32>
    tpu.vector_store %arg5[%c0_6, %c0_7], %10 {strides = array<i32>} : memref<8x128xf32, #tpu.memory_space<vmem>>, vector<8x128xf32>,
    %c0_8 = arith.constant 0 : index
    %c0_9 = arith.constant 0 : index
    %12 = vector.load %arg6[%c0_8, %c0_9] : memref<8x128xf32, #tpu.memory_space<vmem>>, vector<8x128xf32>
    %13 = arith.mulf %6, %6 : vector<2x8x128xf32>
    %cst_10 = arith.constant dense<0.000000e+00> : vector<8x128xf32>
    %14 = vector.multi_reduction <add>, %13, %cst_10 [0] : vector<2x8x128xf32> to vector<8x128xf32>
    %15 = arith.addf %12, %14 : vector<8x128xf32>
    %c0_11 = arith.constant 0 : index
    %c0_12 = arith.constant 0 : index
    %16 = vector.load %arg6[%c0_11, %c0_12] : memref<8x128xf32, #tpu.memory_space<vmem>>, vector<8x128xf32>
    tpu.vector_store %arg6[%c0_11, %c0_12], %15 {strides = array<i32>} : memref<8x128xf32, #tpu.memory_space<vmem>>, vector<8x128xf32>,
    %c0_i32_13 = arith.constant 0 : i32
    %17 = arith.cmpi eq, %arg1, %c0_i32_13 : i32
    %18 = arith.extui %17 : i1 to i32
    %c0_i32_14 = arith.constant 0 : i32
    %19 = arith.cmpi ne, %18, %c0_i32_14 : i32
    scf.if %19 {
      %c0_15 = arith.constant 0 : index
      %c0_16 = arith.constant 0 : index
      %20 = vector.load %arg5[%c0_15, %c0_16] : memref<8x128xf32, #tpu.memory_space<vmem>>, vector<8x128xf32>
      %c0_17 = arith.constant 0 : index
      %c0_18 = arith.constant 0 : index
      %c0_19 = arith.constant 0 : index
      %21 = vector.load %arg4[%c0_17, %c0_18, %c0_19] : memref<1x16x128xf32, #tpu.memory_space<vmem>>, vector<1x8x128xf32>
      %22 = vector.shape_cast %21 : vector<1x8x128xf32> to vector<8x128xf32>
      %23 = vector.shape_cast %20 : vector<8x128xf32> to vector<1x8x128xf32>
      tpu.vector_store %arg4[%c0_17, %c0_18, %c0_19], %23 {strides = array<i32>} : memref<1x16x128xf32, #tpu.memory_space<vmem>>, vector<1x8x128xf32>,
      %c0_20 = arith.constant 0 : index
      %c0_21 = arith.constant 0 : index
      %24 = vector.load %arg6[%c0_20, %c0_21] : memref<8x128xf32, #tpu.memory_space<vmem>>, vector<8x128xf32>
      %c0_22 = arith.constant 0 : index
      %c8 = arith.constant 8 : index
      %c0_23 = arith.constant 0 : index
      %25 = vector.load %arg4[%c0_22, %c8, %c0_23] : memref<1x16x128xf32, #tpu.memory_space<vmem>>, vector<1x8x128xf32>
      %26 = vector.shape_cast %25 : vector<1x8x128xf32> to vector<8x128xf32>
      %27 = vector.shape_cast %24 : vector<8x128xf32> to vector<1x8x128xf32>
      tpu.vector_store %arg4[%c0_22, %c8, %c0_23], %27 {strides = array<i32>} : memref<1x16x128xf32, #tpu.memory_space<vmem>>, vector<1x8x128xf32>,
    } else {
    }
    return
  }
  func.func @transform_0(%arg0: i32, %arg1: i32) -> (i32, i32) {
    %c1_i32 = arith.constant 1 : i32
    %0 = arith.muli %arg0, %c1_i32 : i32
    %1 = arith.addi %0, %arg1 : i32
    %c0_i32 = arith.constant 0 : i32
    %c0_i32_0 = arith.constant 0 : i32
    return %1, %c0_i32 : i32, i32
  }
  func.func @transform_1(%arg0: i32, %arg1: i32) -> (i32, i32) {
    %c1_i32 = arith.constant 1 : i32
    %0 = arith.muli %arg0, %c1_i32 : i32
    %1 = arith.addi %0, %arg1 : i32
    %c0_i32 = arith.constant 0 : i32
    %c0_i32_0 = arith.constant 0 : i32
    return %1, %c0_i32 : i32, i32
  }
  func.func @transform_2(%arg0: i32, %arg1: i32) -> (i32, i32, i32) {
    %c0_i32 = arith.constant 0 : i32
    %c0_i32_0 = arith.constant 0 : i32
    %c0_i32_1 = arith.constant 0 : i32
    return %arg0, %c0_i32, %c0_i32_0 : i32, i32, i32
  }
}

</mosaic_0001>

<llo_original>
// kernel: tpu_custom_call.1
$region0: #{tpu_custom_call.1}
  #allocation0 [shape = 'u32[]', space=smem, size = 0x4, offset = 0x4, fixed_abs, tag = 'smem constant byte address 0x4 - core index']
  #allocation1 [shape = 'u32[144,128]{1,0:T(1,128)}', space=vmem, size = 0x12000, scoped, tag = 'internal scratch']
  #allocation2 [shape = 'f32[8,128]{1,0:T(8,128)}', space=vmem, size = 0x1000, scoped, tag = 'scratch operand']
  #allocation3 [shape = 'f32[8,128]{1,0:T(8,128)}', space=vmem, size = 0x1000, scoped, tag = 'scratch operand']
  %s0 = inlined_call_operand.hbm [shape: f32[16,128], index: 0, kind: input, shape index: {}]
  %s1 = inlined_call_operand.hbm [shape: f32[16,128], index: 1, kind: input, shape index: {}]
  %s2 = inlined_call_operand.hbm [shape: f32[1,16,128], index: 2, kind: output, shape index: {}]
  %s3 = sld [smem:[#allocation0]]
  $region34: #{tpu_custom_call.1} parent=0
    _
  %s5 = ssub.s32 1, %s3
  %s6 = scalar_select 0, %s5, %s3
  $region1: #{tpu_custom_call.1} parent=0
    #allocation4 [shape = 'u8[8192]{0}', space=vmem, size = 0x2000, scoped, tag = 'input window, operand 0, single buffered']
    #allocation5 [shape = 's32[1]{0}', space=sflag, size = 0x4, scoped, tag = 'scoped memory for tpu_custom_call.1']
    #allocation6 [shape = 's32[1]{0}', space=sflag, size = 0x4, scoped, tag = 'scoped memory for tpu_custom_call.1']
    #allocation7 [shape = 'u8[8192]{0}', space=vmem, size = 0x2000, scoped, tag = 'input window, operand 1, single buffered']
    #allocation8 [shape = 's32[1]{0}', space=sflag, size = 0x4, scoped, tag = 'scoped memory for tpu_custom_call.1']
    #allocation9 [shape = 'u8[8192]{0}', space=vmem, size = 0x2000, scoped, tag = 'output window, operand 0, single buffered']
    %7 = vsyncpa [#allocation5], 0
    %8 = vsyncpa [#allocation8], 0
    %9 = vsyncpa [#allocation6], 0
    // Predicated region
    $region2: #{tpu_custom_call.1} parent=1 // pred_check
      _
    $region3: #{tpu_custom_call.1} parent=1 // pred_check_branch
      %11 = sbr.rel (0) target = $region5
    $region4: #{tpu_custom_call.1} parent=1 // pred_region
      %s12 = sadd.s32 0, 0
      %s13 = smul.u32 2, %s12
      %s15 = ssub.s32 256, 256
      %16 = vsyncadd [#allocation5], %s15
      %s17 = smul.addr %s13, 128
      %s18 = scalar_lea.hbm %s0, %s17
      %s19 = sshll.u32 [#allocation4], 4
      %s20 = int_to_ptr.vmem [resolvable:$true] %s19
      %25 = dma.hbm_to_vmem [thread:$0]  %s18, 256, %s20, [#allocation5], 128, 128, 8
    $region5: #{tpu_custom_call.1} parent=1 // pred_fallthru
      _
    // Predicated region
    $region6: #{tpu_custom_call.1} parent=1 // pred_check
      _
    $region7: #{tpu_custom_call.1} parent=1 // pred_check_branch
      %27 = sbr.rel (0) target = $region9
    $region8: #{tpu_custom_call.1} parent=1 // pred_region
      %s28 = sadd.s32 0, 0
      %s29 = smul.u32 2, %s28
      %s31 = ssub.s32 256, 256
      %32 = vsyncadd [#allocation8], %s31
      %s33 = smul.addr %s29, 128
      %s34 = scalar_lea.hbm %s1, %s33
      %s35 = sshll.u32 [#allocation7], 4
      %s36 = int_to_ptr.vmem [resolvable:$true] %s35
      %41 = dma.hbm_to_vmem [thread:$0]  %s34, 256, %s36, [#allocation8], 128, 128, 8
    $region9: #{tpu_custom_call.1} parent=1 // pred_fallthru
      _
    // Predicated region
    $region10: #{tpu_custom_call.1} parent=1 // pred_check
      _
    $region11: #{tpu_custom_call.1} parent=1 // pred_check_branch
      %43 = sbr.rel (0) target = $region13
    $region12: #{tpu_custom_call.1} parent=1 // pred_region
      %44 = dma.done [#allocation5], 256
    $region13: #{tpu_custom_call.1} parent=1 // pred_fallthru
      _
    // Predicated region
    $region14: #{tpu_custom_call.1} parent=1 // pred_check
      _
    $region15: #{tpu_custom_call.1} parent=1 // pred_check_branch
      %46 = sbr.rel (0) target = $region17
    $region16: #{tpu_custom_call.1} parent=1 // pred_region
      %47 = dma.done [#allocation8], 256
    $region17: #{tpu_custom_call.1} parent=1 // pred_fallthru
      _
    %s48 = sadd.s32 0, 0
    %s49 = smul.u32 2, %s48
    %s50 = sadd.s32 0, 0
    %s51 = smul.u32 2, %s50
    %p52 = scmp.eq.s32.totalorder 0, 0
    // Predicated region
    $region18: #{tpu_custom_call.1} parent=1 // pred_check
      %p53 = pneg %p52
    $region19: #{tpu_custom_call.1} parent=1 // pred_check_branch
      %55 = sbr.rel (%p53) target = $region21
    $region20: #{tpu_custom_call.1} parent=1 // pred_region
      %56 = vst [vmem:[#allocation2] sm:$0xff] 0.0
      %57 = vst [vmem:[#allocation3] sm:$0xff] 0.0
    $region21: #{tpu_custom_call.1} parent=1 // pred_fallthru
      _
    %v58 = vld [vmem:[#allocation4] sm:$0xff]
    %v59 = vld [vmem:[#allocation4 + $0x8] sm:$0xff]
    %v60 = vld [vmem:[#allocation7] sm:$0xff]
    %v61 = vld [vmem:[#allocation7 + $0x8] sm:$0xff]
    %v62 = vsub.f32 %v58, %v60
    %v63 = vsub.f32 %v59, %v61
    %v64 = vld [vmem:[#allocation2] sm:$0xff]
    %v65 = vand.u32 2147483647, %v62
    %v66 = vand.u32 2147483647, %v63
    %v67 = vadd.f32 %v65, %v66
    %v68 = vadd.f32 %v64, %v67
    %69 = vst [vmem:[#allocation2] sm:$0xff] %v68
    %v70 = vld [vmem:[#allocation3] sm:$0xff]
    %v71 = vmul.f32 %v62, %v62
    %v72 = vmul.f32 %v63, %v63
    %v73 = vadd.f32 %v71, %v72
    %v74 = vadd.f32 %v70, %v73
    %75 = vst [vmem:[#allocation3] sm:$0xff] %v74
    // Predicated region
    $region22: #{tpu_custom_call.1} parent=1 // pred_check
      %p76 = pneg %p52
    $region23: #{tpu_custom_call.1} parent=1 // pred_check_branch
      %78 = sbr.rel (%p76) target = $region25
    $region24: #{tpu_custom_call.1} parent=1 // pred_region
      %v79 = vld [vmem:[#allocation2] sm:$0xff]
      %80 = vst [vmem:[#allocation9] sm:$0xff] %v79
      %v81 = vld [vmem:[#allocation3] sm:$0xff]
      %82 = vst [vmem:[#allocation9 + $0x8] sm:$0xff] %v81
    $region25: #{tpu_custom_call.1} parent=1 // pred_fallthru
      _
    // Predicated region
    $region26: #{tpu_custom_call.1} parent=1 // pred_check
      _
    $region27: #{tpu_custom_call.1} parent=1 // pred_check_branch
      %84 = sbr.rel (0) target = $region29
    $region28: #{tpu_custom_call.1} parent=1 // pred_region
      %s86 = ssub.s32 256, 256
      %87 = vsyncadd [#allocation6], %s86
      %s88 = sshll.u32 [#allocation9], 4
      %s89 = int_to_ptr.vmem [resolvable:$true] %s88
      %94 = dma.vmem_to_hbm [thread:$0]  %s89, 256, %s2, [#allocation6], 128, 128, 8
    $region29: #{tpu_custom_call.1} parent=1 // pred_fallthru
      _
    // Predicated region
    $region30: #{tpu_custom_call.1} parent=1 // pred_check
      _
    $region31: #{tpu_custom_call.1} parent=1 // pred_check_branch
      %96 = sbr.rel (0) target = $region33
    $region32: #{tpu_custom_call.1} parent=1 // pred_region
      %97 = dma.done [#allocation6], 256
    $region33: #{tpu_custom_call.1} parent=1 // pred_fallthru
      _
    %98 = vsyncpa [#allocation5], 1
    %99 = vsyncpa [#allocation8], 1
    %100 = vsyncpa [#allocation6], 1

</llo_original>
